<compile_context>
chip_gen: v6e
topology: v6e:2x2x1
jax: 0.10.0
libtpu: 0.0.40
codegen_flags: <defaults>
</compile_context>

<pallas_src>
import functools
import math

import jax
import jax.numpy as jnp
from jax.experimental import pallas as pl
from jax.experimental.pallas import tpu as pltpu

COMPUTE_DTYPE = jnp.bfloat16          # MXU-native operand dtype (v5e/v6e/v7x)
VMEM_LIMIT = 48 * 1024 * 1024         # <= v7x physical 64 MiB; fine on v5e/v6e


# ----------------------------- tiling helpers ------------------------------

def _row_tile(T, target=512):
    """Largest row tile <= target that divides T (multiple of 8), else T."""
    if T <= target:
        return T
    for t in range(target, 7, -8):
        if T % t == 0:
            return t
    # TODO(synk): pad the token axis for awkward B*L values instead of falling
    #             back to one full-size (possibly huge) block.
    return T


def _ff_chunk(FF, target=512):
    """FFN hidden-dim chunk processed per grid step along the FF axis."""
    if FF <= target:
        return FF
    for c in range(target, 127, -128):
        if FF % c == 0:
            return c
    return FF


def _const_spec(shape, index_map):
    """BlockSpec for blocks whose index never changes across the grid.

    Single-buffered so the resident weight/bias panel is allocated once
    instead of twice (default double-buffering)."""
    return pl.BlockSpec(shape, index_map, pipeline_mode=pl.Buffered(1))


# ----------------------------- Pallas kernels ------------------------------

def _fused_proj_kernel(x_ref, w_ref, b_ref, *o_refs, d_out):
    """One matmul x @ [W_0 | W_1 | ...] + b, split into n lane-dense outputs."""
    x = x_ref[...]                                   # bf16 activations
    y = jnp.dot(x, w_ref[...], preferred_element_type=jnp.float32)
    y = y + b_ref[...]                               # bias add in f32
    for i, o_ref in enumerate(o_refs):
        o_ref[...] = y[:, i * d_out:(i + 1) * d_out].astype(o_ref.dtype)


def fused_proj(x, w, b, n_out):
    """x:(T,Din) @ w:(Din, n_out*Dout) + b -> tuple of n_out (T,Dout) arrays."""
    T, Din = x.shape
    Dtot = w.shape[1]
    Dout = Dtot // n_out
    tm = _row_tile(T)
    kern = functools.partial(_fused_proj_kernel, d_out=Dout)
    # TODO(synk): for very large Din/Dout (e.g. D>=2048 on v7x) add K/N grid
    #             axes with an f32 VMEM accumulator instead of full panels.
    return pl.pallas_call(
        kern,
        out_shape=tuple(jax.ShapeDtypeStruct((T, Dout), x.dtype)
                        for _ in range(n_out)),
        grid=(T // tm,),
        in_specs=[
            pl.BlockSpec((tm, Din), lambda i: (i, 0)),
            _const_spec((Din, Dtot), lambda i: (0, 0)),
            _const_spec((1, Dtot), lambda i: (0, 0)),
        ],
        out_specs=tuple(pl.BlockSpec((tm, Dout), lambda i: (i, 0))
                        for _ in range(n_out)),
        compiler_params=pltpu.CompilerParams(
            dimension_semantics=("parallel",),
            vmem_limit_bytes=VMEM_LIMIT),
    )(x, w, b.reshape(1, Dtot))


def _attn_kernel(q_ref, k_ref, v_ref, o_ref, o_acc, *, n_heads, scale, causal,
                 tq):
    """One (batch, Lq-tile) per grid step; all heads processed in the step."""
    qi = pl.program_id(1)
    q = q_ref[0]                 # (tq, D) bf16, heads folded into the lane axis
    k = k_ref[0]                 # (Lk, D) bf16
    v = v_ref[0]                 # (Lk, D) bf16
    Lk = k.shape[0]
    D = q.shape[1]
    dh = D // n_heads

    for h in range(n_heads):                      # static slice of the lane dim
        sl = slice(h * dh, (h + 1) * dh)
        # bf16 operands into the MXU, f32 accumulation; scale applied in f32.
        s = jax.lax.dot_general(q[:, sl], k[:, sl], (((1,), (1,)), ((), ())),
                                preferred_element_type=jnp.float32) * scale
        if causal:
            # torch passes tril(ones) as a *float* additive mask: +1 allowed,
            # +0 future.  Reproduced exactly (it does NOT mask future tokens).
            # Regenerated per head so the (tq, Lk) tensor is never pinned live
            # across the whole unrolled head loop (cheap VPU filler).
            row = qi * tq + jax.lax.broadcasted_iota(jnp.int32, (tq, Lk), 0)
            col = jax.lax.broadcasted_iota(jnp.int32, (tq, Lk), 1)
            s = jnp.where(row >= col, s + 1.0, s)
        s = s - jnp.max(s, axis=-1, keepdims=True)
        p = jnp.exp(s)
        p = p / jnp.sum(p, axis=-1, keepdims=True)    # exact divide (EUP slack)
        # one head live at a time: write into the f32 VMEM scratch slab
        o_acc[:, sl] = jnp.dot(p.astype(v.dtype), v[:, sl],
                               preferred_element_type=jnp.float32)
    o_ref[0] = o_acc[...].astype(o_ref.dtype)         # single lane-dense store


def attention(q, k, v, n_heads, causal):
    """q:(B,Lq,D), k/v:(B,Lk,D) -> (B,Lq,D). Additive-mask torch semantics."""
    B, Lq, D = q.shape
    Lk = k.shape[1]
    scale = 1.0 / math.sqrt(D // n_heads)
    tq = _row_tile(Lq, target=256)
    kern = functools.partial(_attn_kernel, n_heads=n_heads, scale=scale,
                             causal=causal, tq=tq)
    # TODO(synk): for long Lk, add an Lk grid axis with online-softmax
    #             accumulators (flash pattern, 'arbitrary').
    # TODO(synk): pad dh to 128 lanes in the QKV layout so head slices land on
    #             vreg boundaries (better MXU contraction utilization); try
    #             pltpu.CORE_PARALLEL on the leading axes for v7x 2-TC splits.
    return pl.pallas_call(
        kern,
        out_shape=jax.ShapeDtypeStruct((B, Lq, D), q.dtype),
        grid=(B, Lq // tq),
        in_specs=[
            pl.BlockSpec((1, tq, D), lambda b, i: (b, i, 0)),
            pl.BlockSpec((1, Lk, D), lambda b, i: (b, 0, 0)),
            pl.BlockSpec((1, Lk, D), lambda b, i: (b, 0, 0)),
        ],
        out_specs=pl.BlockSpec((1, tq, D), lambda b, i: (b, i, 0)),
        scratch_shapes=[pltpu.VMEM((tq, D), jnp.float32)],
        compiler_params=pltpu.CompilerParams(
            dimension_semantics=("parallel", "parallel"),
            vmem_limit_bytes=VMEM_LIMIT),
    )(q, k, v)


def _proj_add_ln_kernel(a_ref, r_ref, w_ref, b_ref, g_ref, bb_ref, o_ref, *,
                        eps):
    """out = LayerNorm(residual + a @ W + b)   (post-norm epilogue fused)."""
    y = jnp.dot(a_ref[...], w_ref[...], preferred_element_type=jnp.float32)
    h = y + b_ref[...] + r_ref[...].astype(jnp.float32)
    mean = jnp.mean(h, axis=-1, keepdims=True)
    var = jnp.mean(jnp.square(h - mean), axis=-1, keepdims=True)
    hn = (h - mean) * jax.lax.rsqrt(var + eps)
    o_ref[...] = (hn * g_ref[...] + bb_ref[...]).astype(o_ref.dtype)


def proj_add_ln(a, resid, w, b, gamma, beta, eps=1e-5):
    T, Din = a.shape
    Dout = w.shape[1]
    tm = _row_tile(T)
    kern = functools.partial(_proj_add_ln_kernel, eps=eps)
    return pl.pallas_call(
        kern,
        out_shape=jax.ShapeDtypeStruct((T, Dout), a.dtype),
        grid=(T // tm,),
        in_specs=[
            pl.BlockSpec((tm, Din), lambda i: (i, 0)),
            pl.BlockSpec((tm, Dout), lambda i: (i, 0)),
            _const_spec((Din, Dout), lambda i: (0, 0)),
            _const_spec((1, Dout), lambda i: (0, 0)),
            _const_spec((1, Dout), lambda i: (0, 0)),
            _const_spec((1, Dout), lambda i: (0, 0)),
        ],
        out_specs=pl.BlockSpec((tm, Dout), lambda i: (i, 0)),
        compiler_params=pltpu.CompilerParams(
            dimension_semantics=("parallel",),
            vmem_limit_bytes=VMEM_LIMIT),
    )(a, resid, w, b.reshape(1, Dout), gamma.reshape(1, Dout),
      beta.reshape(1, Dout))


def _ffn_add_ln_kernel(x_ref, w1_ref, b1_ref, w2_ref, b2_ref, g_ref, bb_ref,
                       o_ref, acc_ref, *, eps):
    """out = LayerNorm(x + relu(x@W1+b1)@W2 + b2).

    FF axis is a grid axis: weight panels stream as (D, fc)/(fc, D) chunks,
    partial sums live in the f32 VMEM accumulator; the (tm, FF) intermediate
    never touches HBM."""
    j = pl.program_id(1)

    @pl.when(j == 0)
    def _init():
        acc_ref[...] = jnp.zeros_like(acc_ref)

    x = x_ref[...]                                   # bf16 activations
    h = jnp.dot(x, w1_ref[...], preferred_element_type=jnp.float32)
    h = jnp.maximum(h + b1_ref[...], 0.0)
    # explicit policy: bf16 operands into the MXU, f32 accumulation
    acc_ref[...] += jnp.dot(h.astype(x.dtype), w2_ref[...],
                            preferred_element_type=jnp.float32)

    @pl.when(j == pl.num_programs(1) - 1)
    def _finalize():
        hh = acc_ref[...] + b2_ref[...] + x.astype(jnp.float32)
        mean = jnp.mean(hh, axis=-1, keepdims=True)
        var = jnp.mean(jnp.square(hh - mean), axis=-1, keepdims=True)
        hn = (hh - mean) * jax.lax.rsqrt(var + eps)
        o_ref[...] = (hn * g_ref[...] + bb_ref[...]).astype(o_ref.dtype)


def ffn_add_ln(x, w1, b1, w2, b2, gamma, beta, eps=1e-5):
    T, D = x.shape
    FF = w1.shape[1]
    tm = _row_tile(T)
    fc = _ff_chunk(FF)
    kern = functools.partial(_ffn_add_ln_kernel, eps=eps)
    return pl.pallas_call(
        kern,
        out_shape=jax.ShapeDtypeStruct((T, D), x.dtype),
        grid=(T // tm, FF // fc),
        in_specs=[
            pl.BlockSpec((tm, D), lambda i, j: (i, 0)),
            pl.BlockSpec((D, fc), lambda i, j: (0, j)),
            pl.BlockSpec((1, fc), lambda i, j: (0, j)),
            pl.BlockSpec((fc, D), lambda i, j: (j, 0)),
            _const_spec((1, D), lambda i, j: (0, 0)),
            _const_spec((1, D), lambda i, j: (0, 0)),
            _const_spec((1, D), lambda i, j: (0, 0)),
        ],
        out_specs=pl.BlockSpec((tm, D), lambda i, j: (i, 0)),
        scratch_shapes=[pltpu.VMEM((tm, D), jnp.float32)],
        compiler_params=pltpu.CompilerParams(
            dimension_semantics=("parallel", "arbitrary"),
            vmem_limit_bytes=VMEM_LIMIT),
    )(x, w1, b1.reshape(1, FF), w2, b2.reshape(1, D), gamma.reshape(1, D),
      beta.reshape(1, D))


# --------------------------- model wiring (glue) ---------------------------

def decoder_layer(x_tok, mem_tok, p, B, L, S, n_heads):
    """TransformerDecoderLayer, norm_order='post': x = LN(x + sublayer(x))."""
    # TODO(synk): norm_order='pre' branch and nn.Dropout (train mode) are not
    #             implemented; default 'post' + eval-mode semantics only.
    # TODO(synk): optionally fuse the QKV / KV projections into the attention
    #             kernels (biggest relative HBM-traffic win on v5e).
    D = x_tok.shape[-1]

    # self-attention sublayer
    q, k, v = fused_proj(x_tok, p["sa_w_qkv"], p["sa_b_qkv"], 3)
    a = attention(q.reshape(B, L, D), k.reshape(B, L, D), v.reshape(B, L, D),
                  n_heads, causal=True).reshape(B * L, D)
    x_tok = proj_add_ln(a, x_tok, p["sa_w_o"], p["sa_b_o"],
                        p["ln1_g"], p["ln1_b"])

    # cross-attention sublayer (memory_mask=None)
    (q,) = fused_proj(x_tok, p["ca_w_q"], p["ca_b_q"], 1)
    k, v = fused_proj(mem_tok, p["ca_w_kv"], p["ca_b_kv"], 2)
    a = attention(q.reshape(B, L, D), k.reshape(B, S, D), v.reshape(B, S, D),
                  n_heads, causal=False).reshape(B * L, D)
    x_tok = proj_add_ln(a, x_tok, p["ca_w_o"], p["ca_b_o"],
                        p["ln2_g"], p["ln2_b"])

    # feed-forward sublayer (fused, FF axis gridded)
    x_tok = ffn_add_ln(x_tok, p["w1"], p["b1"], p["w2"], p["b2"],
                       p["ln3_g"], p["ln3_b"])
    return x_tok


def transformer_decoder(tgt, memory, params, n_heads):
    """tgt: (B, L, D) batch-first, memory: (B, S, D) batch-first."""
    B, L, D = tgt.shape
    S = memory.shape[1]
    # bf16 activations between kernels (halves HBM traffic); stats stay f32.
    x = tgt.reshape(B * L, D).astype(COMPUTE_DTYPE)
    mem = memory.reshape(B * S, D).astype(COMPUTE_DTYPE)
    for p in params["layers"]:
        x = decoder_layer(x, mem, p, B, L, S, n_heads)
    return x.reshape(B, L, D).astype(tgt.dtype)


# ------------------------- deterministic parameters -------------------------

def init_layer_params(key, d_model, d_ff):
    ks = jax.random.split(key, 7)
    s = 0.05

    def nrm(k, shape):
        # weights stored bf16 so the MXU gets native bf16 operands
        return (jax.random.normal(k, shape, jnp.float32) * s).astype(COMPUTE_DTYPE)

    ones = jnp.ones((d_model,), jnp.float32)
    zeros = jnp.zeros((d_model,), jnp.float32)
    return dict(
        sa_w_qkv=nrm(ks[0], (d_model, 3 * d_model)),
        sa_b_qkv=jnp.zeros((3 * d_model,), jnp.float32),
        sa_w_o=nrm(ks[1], (d_model, d_model)), sa_b_o=zeros,
        ca_w_q=nrm(ks[2], (d_model, d_model)), ca_b_q=zeros,
        ca_w_kv=nrm(ks[3], (d_model, 2 * d_model)),
        ca_b_kv=jnp.zeros((2 * d_model,), jnp.float32),
        ca_w_o=nrm(ks[4], (d_model, d_model)), ca_b_o=zeros,
        w1=nrm(ks[5], (d_model, d_ff)), b1=jnp.zeros((d_ff,), jnp.float32),
        w2=nrm(ks[6], (d_ff, d_model)), b2=zeros,
        ln1_g=ones, ln1_b=zeros,
        ln2_g=ones, ln2_b=zeros,
        ln3_g=ones, ln3_b=zeros,
    )


# ------------------------- pure-JAX references (check) ----------------------

def _ref_ln_f32(h, g, b, eps=1e-5):
    m = jnp.mean(h, axis=-1, keepdims=True)
    v = jnp.mean(jnp.square(h - m), axis=-1, keepdims=True)
    return (h - m) * jax.lax.rsqrt(v + eps) * g + b


def _ref_attention_matched(q, k, v, n_heads, causal):
    """Mirrors the kernel's dtype policy: bf16 operands, f32 accumulation."""
    B, Lq, D = q.shape
    Lk = k.shape[1]
    dh = D // n_heads
    scale = 1.0 / math.sqrt(dh)
    qh = q.reshape(B, Lq, n_heads, dh).transpose(0, 2, 1, 3)
    kh = k.reshape(B, Lk, n_heads, dh).transpose(0, 2, 1, 3)
    vh = v.reshape(B, Lk, n_heads, dh).transpose(0, 2, 1, 3)
    s = jnp.einsum("bhqd,bhkd->bhqk", qh, kh,
                   preferred_element_type=jnp.float32) * scale
    if causal:
        s = s + jnp.tril(jnp.ones((Lq, Lk), jnp.float32))  # torch additive mask
    s = s - jnp.max(s, axis=-1, keepdims=True)
    p = jnp.exp(s)
    p = p / jnp.sum(p, axis=-1, keepdims=True)
    o = jnp.einsum("bhqk,bhkd->bhqd", p.astype(v.dtype), vh,
                   preferred_element_type=jnp.float32)
    return o.transpose(0, 2, 1, 3).reshape(B, Lq, D).astype(q.dtype)


def _ref_decoder_matched(tgt, memory, params, n_heads):
    """Pure-JAX reference with the same bf16-operand / f32-accum policy."""
    B, L, D = tgt.shape
    S = memory.shape[1]
    dt = COMPUTE_DTYPE
    x = tgt.reshape(B * L, D).astype(dt)
    mem = memory.reshape(B * S, D).astype(dt)
    for p in params["layers"]:
        qkv = jnp.dot(x, p["sa_w_qkv"],
                      preferred_element_type=jnp.float32) + p["sa_b_qkv"]
        q, k, v = (qkv[:, :D].astype(dt), qkv[:, D:2 * D].astype(dt),
                   qkv[:, 2 * D:].astype(dt))
        a = _ref_attention_matched(q.reshape(B, L, D), k.reshape(B, L, D),
                                   v.reshape(B, L, D), n_heads,
                                   True).reshape(B * L, D)
        h = (jnp.dot(a, p["sa_w_o"], preferred_element_type=jnp.float32)
             + p["sa_b_o"] + x.astype(jnp.float32))
        x = _ref_ln_f32(h, p["ln1_g"], p["ln1_b"]).astype(dt)

        q = (jnp.dot(x, p["ca_w_q"], preferred_element_type=jnp.float32)
             + p["ca_b_q"]).astype(dt)
        kv = jnp.dot(mem, p["ca_w_kv"],
                     preferred_element_type=jnp.float32) + p["ca_b_kv"]
        k, v = kv[:, :D].astype(dt), kv[:, D:].astype(dt)
        a = _ref_attention_matched(q.reshape(B, L, D), k.reshape(B, S, D),
                                   v.reshape(B, S, D), n_heads,
                                   False).reshape(B * L, D)
        h = (jnp.dot(a, p["ca_w_o"], preferred_element_type=jnp.float32)
             + p["ca_b_o"] + x.astype(jnp.float32))
        x = _ref_ln_f32(h, p["ln2_g"], p["ln2_b"]).astype(dt)

        hh = jnp.maximum(jnp.dot(x, p["w1"],
                                 preferred_element_type=jnp.float32) + p["b1"],
                         0.0)
        hh = (jnp.dot(hh.astype(dt), p["w2"],
                      preferred_element_type=jnp.float32) + p["b2"]
              + x.astype(jnp.float32))
        x = _ref_ln_f32(hh, p["ln3_g"], p["ln3_b"]).astype(dt)
    return x.reshape(B, L, D).astype(tgt.dtype)


def _ref_decoder_f32(tgt, memory, params, n_heads):
    """Full-f32 torch-semantics reference (weights upcast)."""
    f32 = lambda a: a.astype(jnp.float32)
    B, L, D = tgt.shape
    S = memory.shape[1]
    x = tgt.reshape(B * L, D)
    mem = memory.reshape(B * S, D)

    def attn(q, k, v, causal, Lq, Lk):
        dh = D // n_heads
        qh = q.reshape(B, Lq, n_heads, dh).transpose(0, 2, 1, 3)
        kh = k.reshape(B, Lk, n_heads, dh).transpose(0, 2, 1, 3)
        vh = v.reshape(B, Lk, n_heads, dh).transpose(0, 2, 1, 3)
        s = jnp.einsum("bhqd,bhkd->bhqk", qh, kh) / math.sqrt(dh)
        if causal:
            s = s + jnp.tril(jnp.ones((Lq, Lk), jnp.float32))
        p = jax.nn.softmax(s, axis=-1)
        o = jnp.einsum("bhqk,bhkd->bhqd", p, vh)
        return o.transpose(0, 2, 1, 3).reshape(B * Lq, D)

    for p in params["layers"]:
        qkv = x @ f32(p["sa_w_qkv"]) + p["sa_b_qkv"]
        q, k, v = qkv[:, :D], qkv[:, D:2 * D], qkv[:, 2 * D:]
        a = attn(q.reshape(B, L, D), k.reshape(B, L, D), v.reshape(B, L, D),
                 True, L, L)
        x = _ref_ln_f32(x + a @ f32(p["sa_w_o"]) + p["sa_b_o"],
                        p["ln1_g"], p["ln1_b"])

        q = x @ f32(p["ca_w_q"]) + p["ca_b_q"]
        kv = mem @ f32(p["ca_w_kv"]) + p["ca_b_kv"]
        k, v = kv[:, :D], kv[:, D:]
        a = attn(q.reshape(B, L, D), k.reshape(B, S, D), v.reshape(B, S, D),
                 False, L, S)
        x = _ref_ln_f32(x + a @ f32(p["ca_w_o"]) + p["ca_b_o"],
                        p["ln2_g"], p["ln2_b"])

        h = jnp.maximum(x @ f32(p["w1"]) + p["b1"], 0.0)
        x = _ref_ln_f32(x + h @ f32(p["w2"]) + p["b2"],
                        p["ln3_g"], p["ln3_b"])
    return x.reshape(B, L, D)


# ----------------------------------- main -----------------------------------

if __name__ == "__main__":
    B, L, S, D, H, FF, NLAYERS = 2, 8, 8, 32, 4, 64, 2

    key = jax.random.PRNGKey(0)
    k_tgt, k_mem, k_par = jax.random.split(key, 3)
    tgt = jax.random.normal(k_tgt, (B, L, D), jnp.float32)
    memory = jax.random.normal(k_mem, (B, S, D), jnp.float32)

    layer_keys = jax.random.split(k_par, NLAYERS)
    params = {"layers": [init_layer_params(k, D, FF) for k in layer_keys]}

    out = transformer_decoder(tgt, memory, params, H)
    out = jax.block_until_ready(out)
    assert out.shape == (B, L, D)

    # Check 1: dtype-matched pure-JAX reference (same bf16-operand / f32-accum
    # policy as the kernels).  Residual differences are a couple of bf16 ulps
    # from cast-boundary straddling plus fp reduction-order noise.
    ref_m = _ref_decoder_matched(tgt, memory, params, H)
    err_m = float(jnp.max(jnp.abs(out - ref_m)))
    assert err_m < 3e-2, f"matched-reference max error {err_m}"

    # Check 2: full-f32 torch-semantics reference.  Tolerance accounts for the
    # bf16 MXU-operand policy (weights + inter-kernel activations) over the
    # two decoder layers.
    ref_f = _ref_decoder_f32(tgt, memory, params, H)
    err_f = float(jnp.max(jnp.abs(out - ref_f)))
    assert err_f < 1e-1, f"f32-reference max error {err_f}"

    print("KERNEL_OK")
</pallas_src>

<mosaic_0001>
module attributes {stable_mosaic.version = 11 : i64} {
  func.func @_fused_proj_kernel(%arg0: i32, %arg1: memref<16x32xbf16, #tpu.memory_space<vmem>>, %arg2: memref<32x96xbf16, #tpu.memory_space<vmem>>, %arg3: memref<1x96xf32, #tpu.memory_space<vmem>>, %arg4: memref<16x32xbf16, #tpu.memory_space<vmem>>, %arg5: memref<16x32xbf16, #tpu.memory_space<vmem>>, %arg6: memref<16x32xbf16, #tpu.memory_space<vmem>>) attributes {dimension_semantics = [#tpu.dimension_semantics<parallel>], iteration_bounds = array<i64: 1>, scalar_prefetch = 0 : i64, scratch_operands = 0 : i64, tpu.core_type = #tpu.core_type<tc>, window_params = [{transform_indices = @transform_0, window_bounds = array<i64: 16, 32>}, {pipeline_mode = #tpu.pipeline_mode<synchronous>, transform_indices = @transform_1, window_bounds = array<i64: 32, 96>}, {pipeline_mode = #tpu.pipeline_mode<synchronous>, transform_indices = @transform_2, window_bounds = array<i64: 1, 96>}, {transform_indices = @transform_3, window_bounds = array<i64: 16, 32>}, {transform_indices = @transform_4, window_bounds = array<i64: 16, 32>}, {transform_indices = @transform_5, window_bounds = array<i64: 16, 32>}]} {
    %c0 = arith.constant 0 : index
    %c0_0 = arith.constant 0 : index
    %0 = vector.load %arg1[%c0, %c0_0] : memref<16x32xbf16, #tpu.memory_space<vmem>>, vector<16x32xbf16>
    %c0_1 = arith.constant 0 : index
    %c0_2 = arith.constant 0 : index
    %1 = vector.load %arg2[%c0_1, %c0_2] : memref<32x96xbf16, #tpu.memory_space<vmem>>, vector<32x96xbf16>
    %cst = arith.constant dense<0.000000e+00> : vector<16x96xf32>
    %2 = tpu.matmul %0, %1, %cst {dimension_numbers = #tpu.dot_dimension_numbers<[1], [0], [0], [1], [0, 0, 1, 1], [], []>} : vector<16x32xbf16>, vector<32x96xbf16>, vector<16x96xf32> -> vector<16x96xf32>
    %c0_3 = arith.constant 0 : index
    %c0_4 = arith.constant 0 : index
    %3 = vector.load %arg3[%c0_3, %c0_4] : memref<1x96xf32, #tpu.memory_space<vmem>>, vector<1x96xf32>
    %4 = vector.broadcast %3 : vector<1x96xf32> to vector<16x96xf32>
    %5 = arith.addf %2, %4 : vector<16x96xf32>
    %6 = vector.extract_strided_slice %5 {offsets = [0, 0], sizes = [16, 32], strides = [1, 1]} : vector<16x96xf32> to vector<16x32xf32>
    %7 = arith.truncf %6 : vector<16x32xf32> to vector<16x32xbf16>
    %c0_5 = arith.constant 0 : index
    %c0_6 = arith.constant 0 : index
    %8 = vector.load %arg4[%c0_5, %c0_6] : memref<16x32xbf16, #tpu.memory_space<vmem>>, vector<16x32xbf16>
    tpu.vector_store %arg4[%c0_5, %c0_6], %7 {strides = array<i32>} : memref<16x32xbf16, #tpu.memory_space<vmem>>, vector<16x32xbf16>,
    %9 = vector.extract_strided_slice %5 {offsets = [0, 32], sizes = [16, 32], strides = [1, 1]} : vector<16x96xf32> to vector<16x32xf32>
    %10 = arith.truncf %9 : vector<16x32xf32> to vector<16x32xbf16>
    %c0_7 = arith.constant 0 : index
    %c0_8 = arith.constant 0 : index
    %11 = vector.load %arg5[%c0_7, %c0_8] : memref<16x32xbf16, #tpu.memory_space<vmem>>, vector<16x32xbf16>
    tpu.vector_store %arg5[%c0_7, %c0_8], %10 {strides = array<i32>} : memref<16x32xbf16, #tpu.memory_space<vmem>>, vector<16x32xbf16>,
    %12 = vector.extract_strided_slice %5 {offsets = [0, 64], sizes = [16, 32], strides = [1, 1]} : vector<16x96xf32> to vector<16x32xf32>
    %13 = arith.truncf %12 : vector<16x32xf32> to vector<16x32xbf16>
    %c0_9 = arith.constant 0 : index
    %c0_10 = arith.constant 0 : index
    %14 = vector.load %arg6[%c0_9, %c0_10] : memref<16x32xbf16, #tpu.memory_space<vmem>>, vector<16x32xbf16>
    tpu.vector_store %arg6[%c0_9, %c0_10], %13 {strides = array<i32>} : memref<16x32xbf16, #tpu.memory_space<vmem>>, vector<16x32xbf16>,
    return
  }
  func.func @transform_0(%arg0: i32) -> (i32, i32) {
    %c0_i32 = arith.constant 0 : i32
    %c0_i32_0 = arith.constant 0 : i32
    return %arg0, %c0_i32 : i32, i32
  }
  func.func @transform_1(%arg0: i32) -> (i32, i32) {
    %c0_i32 = arith.constant 0 : i32
    %c0_i32_0 = arith.constant 0 : i32
    %c0_i32_1 = arith.constant 0 : i32
    return %c0_i32, %c0_i32_0 : i32, i32
  }
  func.func @transform_2(%arg0: i32) -> (i32, i32) {
    %c0_i32 = arith.constant 0 : i32
    %c0_i32_0 = arith.constant 0 : i32
    %c0_i32_1 = arith.constant 0 : i32
    return %c0_i32, %c0_i32_0 : i32, i32
  }
  func.func @transform_3(%arg0: i32) -> (i32, i32) {
    %c0_i32 = arith.constant 0 : i32
    %c0_i32_0 = arith.constant 0 : i32
    return %arg0, %c0_i32 : i32, i32
  }
  func.func @transform_4(%arg0: i32) -> (i32, i32) {
    %c0_i32 = arith.constant 0 : i32
    %c0_i32_0 = arith.constant 0 : i32
    return %arg0, %c0_i32 : i32, i32
  }
  func.func @transform_5(%arg0: i32) -> (i32, i32) {
    %c0_i32 = arith.constant 0 : i32
    %c0_i32_0 = arith.constant 0 : i32
    return %arg0, %c0_i32 : i32, i32
  }
}

</mosaic_0001>

<llo_original>
// kernel: tpu_custom_call.1
$region0: #{tpu_custom_call.1}
  #allocation0 [shape = 'u32[]', space=smem, size = 0x4, offset = 0x4, fixed_abs, tag = 'smem constant byte address 0x4 - core index']
  #allocation1 [shape = 'u32[144,128]{1,0:T(1,128)}', space=vmem, size = 0x12000, scoped, tag = 'internal scratch']
  %s0 = inlined_call_operand.hbm [shape: bf16[16,32], index: 0, kind: input, shape index: {}]
  %s1 = inlined_call_operand.hbm [shape: bf16[32,96], index: 1, kind: input, shape index: {}]
  %s2 = inlined_call_operand.vmem [shape: f32[1,96], index: 2, kind: input, shape index: {}]
  %s3 = inlined_call_operand.hbm [shape: bf16[16,32], index: 3, kind: output, shape index: {0}]
  %s4 = inlined_call_operand.hbm [shape: bf16[16,32], index: 4, kind: output, shape index: {1}]
  %s5 = inlined_call_operand.hbm [shape: bf16[16,32], index: 5, kind: output, shape index: {2}]
  %6 = xla_tuple %s3, %s4, %s5
  %s7 = sld [smem:[#allocation0]]
  $region46: #{tpu_custom_call.1} parent=0
    _
  %s9 = ssub.s32 1, %s7
  %s10 = scalar_select 0, %s9, %s7
  $region1: #{tpu_custom_call.1} parent=0
    #allocation2 [shape = 'u8[4096]{0}', space=vmem, size = 0x1000, scoped, tag = 'input window, operand 0, single buffered']
    #allocation3 [shape = 's32[1]{0}', space=sflag, size = 0x4, scoped, tag = 'scoped memory for tpu_custom_call.1']
    #allocation4 [shape = 's32[1]{0}', space=sflag, size = 0x4, scoped, tag = 'scoped memory for tpu_custom_call.1']
    #allocation5 [shape = 'u8[8192]{0}', space=vmem, size = 0x2000, scoped, tag = 'input window, operand 1, single buffered']
    #allocation6 [shape = 's32[1]{0}', space=sflag, size = 0x4, scoped, tag = 'scoped memory for tpu_custom_call.1']
    #allocation7 [shape = 'u8[4096]{0}', space=vmem, size = 0x1000, scoped, tag = 'output window, operand 0, single buffered']
    #allocation8 [shape = 'u8[4096]{0}', space=vmem, size = 0x1000, scoped, tag = 'output window, operand 1, single buffered']
    #allocation9 [shape = 's32[1]{0}', space=sflag, size = 0x4, scoped, tag = 'scoped memory for tpu_custom_call.1']
    #allocation10 [shape = 'u8[4096]{0}', space=vmem, size = 0x1000, scoped, tag = 'output window, operand 2, single buffered']
    %11 = vsyncpa [#allocation3], 0
    %12 = vsyncpa [#allocation6], 0
    %13 = vsyncpa [#allocation4], 0
    %14 = vsyncpa [#allocation9], 0
    // Predicated region
    $region2: #{tpu_custom_call.1} parent=1 // pred_check
      _
    $region3: #{tpu_custom_call.1} parent=1 // pred_check_branch
      %16 = sbr.rel (0) target = $region5
    $region4: #{tpu_custom_call.1} parent=1 // pred_region
      %s18 = ssub.s32 128, 128
      %19 = vsyncadd [#allocation3], %s18
      %s20 = sshll.u32 [#allocation2], 4
      %s21 = int_to_ptr.vmem [resolvable:$true] %s20
      %26 = dma.hbm_to_vmem [thread:$0]  %s0, 128, %s21, [#allocation3], 64, 64, 4
    $region5: #{tpu_custom_call.1} parent=1 // pred_fallthru
      _
    // Predicated region
    $region6: #{tpu_custom_call.1} parent=1 // pred_check
      _
    $region7: #{tpu_custom_call.1} parent=1 // pred_check_branch
      %28 = sbr.rel (0) target = $region9
    $region8: #{tpu_custom_call.1} parent=1 // pred_region
      %s30 = ssub.s32 256, 256
      %31 = vsyncadd [#allocation6], %s30
      %s32 = sshll.u32 [#allocation5], 4
      %s33 = int_to_ptr.vmem [resolvable:$true] %s32
      %38 = dma.hbm_to_vmem [thread:$0]  %s1, 256, %s33, [#allocation6], 64, 64, 4
    $region9: #{tpu_custom_call.1} parent=1 // pred_fallthru
      _
    // Predicated region
    $region10: #{tpu_custom_call.1} parent=1 // pred_check
      _
    $region11: #{tpu_custom_call.1} parent=1 // pred_check_branch
      %40 = sbr.rel (0) target = $region13
    $region12: #{tpu_custom_call.1} parent=1 // pred_region
      _
    $region13: #{tpu_custom_call.1} parent=1 // pred_fallthru
      _
    // Predicated region
    $region14: #{tpu_custom_call.1} parent=1 // pred_check
      _
    $region15: #{tpu_custom_call.1} parent=1 // pred_check_branch
      %42 = sbr.rel (0) target = $region17
    $region16: #{tpu_custom_call.1} parent=1 // pred_region
      %43 = dma.done [#allocation3], 128
    $region17: #{tpu_custom_call.1} parent=1 // pred_fallthru
      _
    // Predicated region
    $region18: #{tpu_custom_call.1} parent=1 // pred_check
      _
    $region19: #{tpu_custom_call.1} parent=1 // pred_check_branch
      %45 = sbr.rel (0) target = $region21
    $region20: #{tpu_custom_call.1} parent=1 // pred_region
      %46 = dma.done [#allocation6], 256
    $region21: #{tpu_custom_call.1} parent=1 // pred_fallthru
      _
    %v48 = vld [vmem:[#allocation2] sm:$0xf]
    %v49 = vld [vmem:[#allocation2 + $0x4] sm:$0xf]
    %v50 = vld [vmem:[#allocation5] sm:$0xf]
    %v51 = vld [vmem:[#allocation5 + $0x4] sm:$0xf]
    %v52 = vld [vmem:[#allocation5 + $0x8] sm:$0xf]
    %v53 = vld [vmem:[#allocation5 + $0xc] sm:$0xf]
    %v54 = vld [vmem:[%s2] sm:$0x1]
    %v56 = vlaneseq
    %v57 = vshrl.u32 %v56, 7
    %v58 = vsub.s32 0, %v57
    %v59 = vrot.slane %v54, %v58
    %v63 = vunpack.c.l.b16 %v48
    %v64 = vunpack.c.l.b16 %v49
    %v65 = vpack.c.b16 %v64, %v63
    %v70 = vunpack.c.l.b16 %v50
    %v71 = vunpack.c.l.b16 %v51
    %v72 = vunpack.c.l.b16 %v52
    %v73 = vunpack.c.l.b16 %v53
    %v74 = vpack.c.b16 %v71, %v70
    %v75 = vpack.c.b16 %v73, %v72
    %vm78 = vcmask 261120
    %v80 = vsel %vm78, %v65, 0
    %82 = vmatprep.subr.bf16.mxu0 0
    %83 = vmatpush1.bf16.msra.mxu0 0
    %84 = vmatprep.subr.bf16.mxu0 0
    %85 = vmatpush1.bf16.msra.mxu0 0
    %86 = vmatprep.subr.bf16.mxu0 0
    %87 = vmatpush1.bf16.msra.mxu0 0
    %88 = vmatprep.subr.bf16.mxu0 0
    %89 = vmatpush1.bf16.msra.mxu0 0
    %90 = vmatprep.subr.bf16.mxu0 0
    %91 = vmatpush1.bf16.msra.mxu0 0
    %92 = vmatprep.subr.bf16.mxu0 0
    %93 = vmatpush1.bf16.msra.mxu0 0
    %94 = vmatprep.subr.bf16.mxu0 0
    %95 = vmatpush1.bf16.msra.mxu0 %v75
    %96 = vmatprep.subr.bf16.mxu0 0
    %97 = vmatpush1.bf16.msra.mxu0 %v74
    %98 = vmatprep.subr.bf16.mxu0 0
    %99 = vmatpush2.bf16.msra.mxu0 0
    %100 = vmatprep.subr.bf16.mxu0 0
    %101 = vmatpush2.bf16.msra.mxu0 0
    %102 = vmatprep.subr.bf16.mxu0 0
    %103 = vmatpush2.bf16.msra.mxu0 0
    %104 = vmatprep.subr.bf16.mxu0 0
    %105 = vmatpush2.bf16.msra.mxu0 0
    %106 = vmatprep.subr.bf16.mxu0 0
    %107 = vmatpush2.bf16.msra.mxu0 0
    %108 = vmatprep.subr.bf16.mxu0 0
    %109 = vmatpush2.bf16.msra.mxu0 0
    %110 = vmatprep.subr.bf16.mxu0 0
    %111 = vmatpush2.bf16.msra.mxu0 0
    %112 = vmatprep.subr.bf16.mxu0 0
    %113 = vmatpush2.bf16.msra.mxu0 0
    %114 = vmatprep.mubr.bf16.mxu0 0
    %115 = vmatmul.mubr.bf16.gmra.mxu0 %v80
    %v116 = vpop.f32.mrf.mxu0
    %v117 = vadd.f32 %v59, %v116
    %v118 = vpop.f32.mrf.mxu0
    %v119 = vpop.f32.mrf.mxu0
    %v120 = vadd.f32 %v59, %v119
    %v121 = vpop.f32.mrf.mxu0
    %122 = vdwg.mxu0
    %v123 = vpack.c.bf16 %v120, %v117
    %v125 = vunpack.c.l.b16 %v123
    %v126 = vunpack.c.h.b16 %v123
    %v127 = vpack.c.b16 %v125, %v125
    %v128 = vpack.c.b16 %v126, %v126
    %vm131 = vcmask 257024
    %132 = vst.msk [vmem:[#allocation7] sm:$0xf] %vm131, %v127
    %133 = vst.msk [vmem:[#allocation7 + $0x4] sm:$0xf] %vm131, %v128
    %134 = vrot.lane.b32.xlu0 %v127, 96
    %v135 = vpop.permute.xlu0 %134
    %136 = vrot.lane.b32.xlu0 %v128, 96
    %v137 = vpop.permute.xlu0 %136
    %140 = vst.msk [vmem:[#allocation8] sm:$0xf] %vm131, %v135
    %141 = vst.msk [vmem:[#allocation8 + $0x4] sm:$0xf] %vm131, %v137
    %142 = vrot.lane.b32.xlu0 %v127, 64
    %v143 = vpop.permute.xlu0 %142
    %144 = vrot.lane.b32.xlu0 %v128, 64
    %v145 = vpop.permute.xlu0 %144
    %148 = vst.msk [vmem:[#allocation10] sm:$0xf] %vm131, %v143
    %149 = vst.msk [vmem:[#allocation10 + $0x4] sm:$0xf] %vm131, %v145
    // Predicated region
    $region22: #{tpu_custom_call.1} parent=1 // pred_check
      _
    $region23: #{tpu_custom_call.1} parent=1 // pred_check_branch
      %151 = sbr.rel (0) target = $region25
    $region24: #{tpu_custom_call.1} parent=1 // pred_region
      %s153 = ssub.s32 128, 128
      %154 = vsyncadd [#allocation4], %s153
      %s155 = sshll.u32 [#allocation7], 4
      %s156 = int_to_ptr.vmem [resolvable:$true] %s155
      %161 = dma.vmem_to_hbm [thread:$0]  %s156, 128, %s3, [#allocation4], 64, 64, 4
    $region25: #{tpu_custom_call.1} parent=1 // pred_fallthru
      _
    // Predicated region
    $region26: #{tpu_custom_call.1} parent=1 // pred_check
      _
    $region27: #{tpu_custom_call.1} parent=1 // pred_check_branch
      %163 = sbr.rel (0) target = $region29
    $region28: #{tpu_custom_call.1} parent=1 // pred_region
      %s165 = ssub.s32 128, 128
      %166 = vsyncadd [#allocation9], %s165
      %s167 = sshll.u32 [#allocation8], 4
      %s168 = int_to_ptr.vmem [resolvable:$true] %s167
      %173 = dma.vmem_to_hbm [thread:$0]  %s168, 128, %s4, [#allocation9], 64, 64, 4
    $region29: #{tpu_custom_call.1} parent=1 // pred_fallthru
      _
    // Predicated region
    $region30: #{tpu_custom_call.1} parent=1 // pred_check
      _
    $region31: #{tpu_custom_call.1} parent=1 // pred_check_branch
      %175 = sbr.rel (0) target = $region33
    $region32: #{tpu_custom_call.1} parent=1 // pred_region
      %s177 = ssub.s32 128, 128
      %178 = vsyncadd [#allocation9], %s177
      %s179 = sshll.u32 [#allocation10], 4
      %s180 = int_to_ptr.vmem [resolvable:$true] %s179
      %185 = dma.vmem_to_hbm [thread:$0]  %s180, 128, %s5, [#allocation9], 64, 64, 4
    $region33: #{tpu_custom_call.1} parent=1 // pred_fallthru
      _
    // Predicated region
    $region34: #{tpu_custom_call.1} parent=1 // pred_check
      _
    $region35: #{tpu_custom_call.1} parent=1 // pred_check_branch
      %187 = sbr.rel (0) target = $region37
    $region36: #{tpu_custom_call.1} parent=1 // pred_region
      %188 = dma.done [#allocation4], 128
    $region37: #{tpu_custom_call.1} parent=1 // pred_fallthru
      _
    // Predicated region
    $region38: #{tpu_custom_call.1} parent=1 // pred_check
      _
    $region39: #{tpu_custom_call.1} parent=1 // pred_check_branch
      %190 = sbr.rel (0) target = $region41
    $region40: #{tpu_custom_call.1} parent=1 // pred_region
      %191 = dma.done [#allocation9], 128
    $region41: #{tpu_custom_call.1} parent=1 // pred_fallthru
      _
    // Predicated region
    $region42: #{tpu_custom_call.1} parent=1 // pred_check
      _
    $region43: #{tpu_custom_call.1} parent=1 // pred_check_branch
      %193 = sbr.rel (0) target = $region45
    $region44: #{tpu_custom_call.1} parent=1 // pred_region
      %194 = dma.done [#allocation9], 128
    $region45: #{tpu_custom_call.1} parent=1 // pred_fallthru
      _
    %195 = vsyncpa [#allocation3], 1
    %196 = vsyncpa [#allocation6], 1
    %197 = vsyncpa [#allocation4], 1
    %198 = vsyncpa [#allocation9], 1

</llo_original>
